<compile_context>
chip_gen: v7x
topology: tpu7x:2x2x1
jax: 0.10.0
libtpu: 0.0.40
codegen_flags: <defaults>
</compile_context>

<pallas_src>
import functools

import jax
import jax.numpy as jnp
from jax.experimental import pallas as pl
from jax.experimental.pallas import tpu as pltpu


def _round_up(v, m):
    return ((v + m - 1) // m) * m


def _lora_linear_kernel(x_ref, w_ref, a_ref, bl_ref, bias_ref, o_ref,
                        acc_ref, xa_ref):
    """One (i, j, k) grid step of the fused base + LoRA linear.

    x_ref   : [tm, tk]      activations tile
    w_ref   : [tk, tn]      base weight tile (transposed vs torch)
    a_ref   : [tk, Rp]      lora A tile (transposed vs torch)
    bl_ref  : [Rp, tn]      lora B tile (transposed vs torch, scaling folded in)
    bias_ref: [1,  tn]      bias tile
    o_ref   : [tm, tn]      output tile
    acc_ref : [tm, tn] f32  base-matmul accumulator (scratch)
    xa_ref  : [tm, Rp] f32  x @ A accumulator, shared across N tiles (scratch)
    """
    j = pl.program_id(1)
    k = pl.program_id(2)
    nk = pl.num_programs(2)

    @pl.when(k == 0)
    def _():
        acc_ref[...] = jnp.zeros_like(acc_ref)

    # New M tile starts at (j == 0, k == 0): reset the x@A accumulator.
    @pl.when(jnp.logical_and(j == 0, k == 0))
    def _():
        xa_ref[...] = jnp.zeros_like(xa_ref)

    x = x_ref[...]

    # Base projection on the MXU, accumulate in f32 across K.
    acc_ref[...] += jnp.dot(x, w_ref[...], preferred_element_type=jnp.float32)

    # Low-rank A projection: independent of the N tile, so accumulate it only
    # while sweeping K for j == 0 and reuse for all other N tiles of this i.
    @pl.when(j == 0)
    def _():
        xa_ref[...] += jnp.dot(x, a_ref[...],
                               preferred_element_type=jnp.float32)

    # Epilogue: apply the low-rank update + bias once per (i, j) tile.
    @pl.when(k == nk - 1)
    def _():
        lora = jnp.dot(xa_ref[...].astype(bl_ref.dtype), bl_ref[...],
                       preferred_element_type=jnp.float32)
        out = acc_ref[...] + lora + bias_ref[...]
        o_ref[...] = out.astype(o_ref.dtype)


def lora_linear(x, w, bias, lora_a, lora_b, *, lora_alpha, r,
                tm=256, tn=256, tk=256):
    """x: [B, S, K]; w: [K, N]; bias: [N]; lora_a: [K, R]; lora_b: [R, N]."""
    B, S, K = x.shape
    N = w.shape[1]
    M = B * S
    scaling = float(lora_alpha) / float(r)

    # Fold scaling into lora_B once (weight-prep), removing a per-tile multiply.
    lora_b_scaled = (lora_b * scaling).astype(lora_b.dtype)

    # Pad R up to the sublane packing multiple of the dtype (8 f32, 16 bf16).
    itemsize = jnp.dtype(x.dtype).itemsize
    r_mult = max(8, 32 // itemsize)
    Rp = _round_up(r, r_mult)

    # Clamp tile sizes to the (alignment-padded) problem, then pad arrays so
    # every dim is an exact multiple of its tile.
    tm = min(tm, _round_up(M, 8))
    tk = min(tk, _round_up(K, 128))
    tn = min(tn, _round_up(N, 128))
    Mp = _round_up(M, tm)
    Kp = _round_up(K, tk)
    Np = _round_up(N, tn)

    x2 = jnp.pad(x.reshape(M, K), ((0, Mp - M), (0, Kp - K)))
    w_p = jnp.pad(w, ((0, Kp - K), (0, Np - N)))
    bias_p = jnp.pad(bias.reshape(1, N), ((0, 0), (0, Np - N)))
    a_p = jnp.pad(lora_a, ((0, Kp - K), (0, Rp - r)))
    bl_p = jnp.pad(lora_b_scaled, ((0, Rp - r), (0, Np - N)))

    grid = (Mp // tm, Np // tn, Kp // tk)

    out_p = pl.pallas_call(
        _lora_linear_kernel,
        out_shape=jax.ShapeDtypeStruct((Mp, Np), x.dtype),
        grid_spec=pltpu.PrefetchScalarGridSpec(
            num_scalar_prefetch=0,
            grid=grid,
            in_specs=[
                pl.BlockSpec((tm, tk), lambda i, j, k: (i, k)),   # x
                pl.BlockSpec((tk, tn), lambda i, j, k: (k, j)),   # W
                pl.BlockSpec((tk, Rp), lambda i, j, k: (k, 0)),   # A
                pl.BlockSpec((Rp, tn), lambda i, j, k: (0, j)),   # B (scaled)
                pl.BlockSpec((1, tn), lambda i, j, k: (0, j)),    # bias
            ],
            out_specs=pl.BlockSpec((tm, tn), lambda i, j, k: (i, j)),
            scratch_shapes=[
                pltpu.VMEM((tm, tn), jnp.float32),   # base accumulator
                pltpu.VMEM((tm, Rp), jnp.float32),   # x @ A accumulator
            ],
        ),
        # M is parallel (megacore sharding); N must stay sequential on a core
        # because the xa scratch computed at j==0 is reused for j>0; K is the
        # reduction axis.
        compiler_params=pltpu.CompilerParams(
            dimension_semantics=("parallel", "arbitrary", "arbitrary")),
    )(x2, w_p, a_p, bl_p, bias_p)

    return out_p[:M, :N].reshape(B, S, N)


def lora_linear_ref(x, w, bias, lora_a, lora_b, *, lora_alpha, r):
    """Pure-JAX reference of the same LoRA forward."""
    scaling = float(lora_alpha) / float(r)
    base = jnp.einsum("bsk,kn->bsn", x, w) + bias
    lora = jnp.einsum("bsk,kr,rn->bsn", x, lora_a, lora_b)
    return base + scaling * lora


if __name__ == "__main__":
    # Small shapes consistent with a LoRA-wrapped linear: batch=2, seq=8,
    # hidden(in)=32, out=32, rank=8, lora_alpha=16.  The wrapper pads them to
    # lane/sublane multiples before launching the tiled kernel.
    B, S, K, N, R = 2, 8, 32, 32, 8
    LORA_ALPHA = 16

    key = jax.random.PRNGKey(0)
    kx, kw, kb, ka = jax.random.split(key, 4)

    x = jax.random.normal(kx, (B, S, K), dtype=jnp.float32)
    w = jax.random.normal(kw, (K, N), dtype=jnp.float32) * 0.05
    bias = jax.random.normal(kb, (N,), dtype=jnp.float32) * 0.01
    # Standard LoRA init has B = zeros; use nonzero B so the low-rank path is
    # actually exercised.
    lora_a = jax.random.normal(ka, (K, R), dtype=jnp.float32) * 0.05
    lora_b = jnp.full((R, N), 0.02, dtype=jnp.float32)

    out = lora_linear(x, w, bias, lora_a, lora_b, lora_alpha=LORA_ALPHA, r=R)
    out = jax.block_until_ready(out)

    ref = lora_linear_ref(x, w, bias, lora_a, lora_b, lora_alpha=LORA_ALPHA,
                          r=R)
    assert out.shape == (B, S, N)
    assert jnp.allclose(out, ref, atol=1e-4, rtol=1e-4)

    print("KERNEL_OK")
</pallas_src>

<mosaic_0001>
module attributes {stable_mosaic.version = 11 : i64} {
  func.func @_lora_linear_kernel(%arg0: i32, %arg1: i32, %arg2: i32, %arg3: memref<16x128xf32, #tpu.memory_space<vmem>>, %arg4: memref<128x128xf32, #tpu.memory_space<vmem>>, %arg5: memref<128x8xf32, #tpu.memory_space<vmem>>, %arg6: memref<8x128xf32, #tpu.memory_space<vmem>>, %arg7: memref<1x128xf32, #tpu.memory_space<vmem>>, %arg8: memref<16x128xf32, #tpu.memory_space<vmem>>, %arg9: memref<16x128xf32, #tpu.memory_space<vmem>>, %arg10: memref<16x8xf32, #tpu.memory_space<vmem>>) attributes {dimension_semantics = [#tpu.dimension_semantics<parallel>, #tpu.dimension_semantics<arbitrary>, #tpu.dimension_semantics<arbitrary>], iteration_bounds = array<i64: 1, 1, 1>, scalar_prefetch = 0 : i64, scratch_operands = 2 : i64, tpu.core_type = #tpu.core_type<tc>, window_params = [{transform_indices = @transform_0, window_bounds = array<i64: 16, 128>}, {transform_indices = @transform_1, window_bounds = array<i64: 128, 128>}, {transform_indices = @transform_2, window_bounds = array<i64: 128, 8>}, {transform_indices = @transform_3, window_bounds = array<i64: 8, 128>}, {transform_indices = @transform_4, window_bounds = array<i64: 1, 128>}, {transform_indices = @transform_5, window_bounds = array<i64: 16, 128>}]} {
    %c0_i32 = arith.constant 0 : i32
    %0 = arith.cmpi eq, %arg2, %c0_i32 : i32
    %1 = arith.extui %0 : i1 to i32
    %c0_i32_0 = arith.constant 0 : i32
    %2 = arith.cmpi ne, %1, %c0_i32_0 : i32
    scf.if %2 {
      %cst_15 = arith.constant 0.000000e+00 : f32
      %20 = vector.broadcast %cst_15 : f32 to vector<16x128xf32>
      %c0_16 = arith.constant 0 : index
      %c0_17 = arith.constant 0 : index
      %21 = vector.load %arg9[%c0_16, %c0_17] : memref<16x128xf32, #tpu.memory_space<vmem>>, vector<16x128xf32>
      tpu.vector_store %arg9[%c0_16, %c0_17], %20 {strides = array<i32>} : memref<16x128xf32, #tpu.memory_space<vmem>>, vector<16x128xf32>,
    } else {
    }
    %c0_i32_1 = arith.constant 0 : i32
    %3 = arith.cmpi eq, %arg1, %c0_i32_1 : i32
    %c0_i32_2 = arith.constant 0 : i32
    %4 = arith.cmpi eq, %arg2, %c0_i32_2 : i32
    %5 = arith.andi %3, %4 : i1
    %6 = arith.extui %5 : i1 to i32
    %c0_i32_3 = arith.constant 0 : i32
    %7 = arith.cmpi ne, %6, %c0_i32_3 : i32
    scf.if %7 {
      %cst_15 = arith.constant 0.000000e+00 : f32
      %20 = vector.broadcast %cst_15 : f32 to vector<16x8xf32>
      %c0_16 = arith.constant 0 : index
      %c0_17 = arith.constant 0 : index
      %21 = vector.load %arg10[%c0_16, %c0_17] : memref<16x8xf32, #tpu.memory_space<vmem>>, vector<16x8xf32>
      tpu.vector_store %arg10[%c0_16, %c0_17], %20 {strides = array<i32>} : memref<16x8xf32, #tpu.memory_space<vmem>>, vector<16x8xf32>,
    } else {
    }
    %c0 = arith.constant 0 : index
    %c0_4 = arith.constant 0 : index
    %8 = vector.load %arg3[%c0, %c0_4] : memref<16x128xf32, #tpu.memory_space<vmem>>, vector<16x128xf32>
    %c0_5 = arith.constant 0 : index
    %c0_6 = arith.constant 0 : index
    %9 = vector.load %arg9[%c0_5, %c0_6] : memref<16x128xf32, #tpu.memory_space<vmem>>, vector<16x128xf32>
    %c0_7 = arith.constant 0 : index
    %c0_8 = arith.constant 0 : index
    %10 = vector.load %arg4[%c0_7, %c0_8] : memref<128x128xf32, #tpu.memory_space<vmem>>, vector<128x128xf32>
    %cst = arith.constant dense<0.000000e+00> : vector<16x128xf32>
    %11 = tpu.matmul %8, %10, %cst {dimension_numbers = #tpu.dot_dimension_numbers<[1], [0], [0], [1], [0, 0, 1, 1], [], []>} : vector<16x128xf32>, vector<128x128xf32>, vector<16x128xf32> -> vector<16x128xf32>
    %12 = arith.addf %9, %11 : vector<16x128xf32>
    %c0_9 = arith.constant 0 : index
    %c0_10 = arith.constant 0 : index
    %13 = vector.load %arg9[%c0_9, %c0_10] : memref<16x128xf32, #tpu.memory_space<vmem>>, vector<16x128xf32>
    tpu.vector_store %arg9[%c0_9, %c0_10], %12 {strides = array<i32>} : memref<16x128xf32, #tpu.memory_space<vmem>>, vector<16x128xf32>,
    %c0_i32_11 = arith.constant 0 : i32
    %14 = arith.cmpi eq, %arg1, %c0_i32_11 : i32
    %15 = arith.extui %14 : i1 to i32
    %c0_i32_12 = arith.constant 0 : i32
    %16 = arith.cmpi ne, %15, %c0_i32_12 : i32
    scf.if %16 {
      %c0_15 = arith.constant 0 : index
      %c0_16 = arith.constant 0 : index
      %20 = vector.load %arg10[%c0_15, %c0_16] : memref<16x8xf32, #tpu.memory_space<vmem>>, vector<16x8xf32>
      %c0_17 = arith.constant 0 : index
      %c0_18 = arith.constant 0 : index
      %21 = vector.load %arg5[%c0_17, %c0_18] : memref<128x8xf32, #tpu.memory_space<vmem>>, vector<128x8xf32>
      %cst_19 = arith.constant dense<0.000000e+00> : vector<16x8xf32>
      %22 = tpu.matmul %8, %21, %cst_19 {dimension_numbers = #tpu.dot_dimension_numbers<[1], [0], [0], [1], [0, 0, 1, 1], [], []>} : vector<16x128xf32>, vector<128x8xf32>, vector<16x8xf32> -> vector<16x8xf32>
      %23 = arith.addf %20, %22 : vector<16x8xf32>
      %c0_20 = arith.constant 0 : index
      %c0_21 = arith.constant 0 : index
      %24 = vector.load %arg10[%c0_20, %c0_21] : memref<16x8xf32, #tpu.memory_space<vmem>>, vector<16x8xf32>
      tpu.vector_store %arg10[%c0_20, %c0_21], %23 {strides = array<i32>} : memref<16x8xf32, #tpu.memory_space<vmem>>, vector<16x8xf32>,
    } else {
    }
    %c0_i32_13 = arith.constant 0 : i32
    %17 = arith.cmpi eq, %arg2, %c0_i32_13 : i32
    %18 = arith.extui %17 : i1 to i32
    %c0_i32_14 = arith.constant 0 : i32
    %19 = arith.cmpi ne, %18, %c0_i32_14 : i32
    scf.if %19 {
      %c0_15 = arith.constant 0 : index
      %c0_16 = arith.constant 0 : index
      %20 = vector.load %arg10[%c0_15, %c0_16] : memref<16x8xf32, #tpu.memory_space<vmem>>, vector<16x8xf32>
      %c0_17 = arith.constant 0 : index
      %c0_18 = arith.constant 0 : index
      %21 = vector.load %arg6[%c0_17, %c0_18] : memref<8x128xf32, #tpu.memory_space<vmem>>, vector<8x128xf32>
      %cst_19 = arith.constant dense<0.000000e+00> : vector<16x128xf32>
      %22 = tpu.matmul %20, %21, %cst_19 {dimension_numbers = #tpu.dot_dimension_numbers<[1], [0], [0], [1], [0, 0, 1, 1], [], []>} : vector<16x8xf32>, vector<8x128xf32>, vector<16x128xf32> -> vector<16x128xf32>
      %c0_20 = arith.constant 0 : index
      %c0_21 = arith.constant 0 : index
      %23 = vector.load %arg9[%c0_20, %c0_21] : memref<16x128xf32, #tpu.memory_space<vmem>>, vector<16x128xf32>
      %24 = arith.addf %23, %22 : vector<16x128xf32>
      %c0_22 = arith.constant 0 : index
      %c0_23 = arith.constant 0 : index
      %25 = vector.load %arg7[%c0_22, %c0_23] : memref<1x128xf32, #tpu.memory_space<vmem>>, vector<1x128xf32>
      %26 = vector.broadcast %25 : vector<1x128xf32> to vector<16x128xf32>
      %27 = arith.addf %24, %26 : vector<16x128xf32>
      %c0_24 = arith.constant 0 : index
      %c0_25 = arith.constant 0 : index
      %28 = vector.load %arg8[%c0_24, %c0_25] : memref<16x128xf32, #tpu.memory_space<vmem>>, vector<16x128xf32>
      tpu.vector_store %arg8[%c0_24, %c0_25], %27 {strides = array<i32>} : memref<16x128xf32, #tpu.memory_space<vmem>>, vector<16x128xf32>,
    } else {
    }
    return
  }
  func.func @transform_0(%arg0: i32, %arg1: i32, %arg2: i32) -> (i32, i32) {
    %c0_i32 = arith.constant 0 : i32
    return %arg0, %arg2 : i32, i32
  }
  func.func @transform_1(%arg0: i32, %arg1: i32, %arg2: i32) -> (i32, i32) {
    %c0_i32 = arith.constant 0 : i32
    return %arg2, %arg1 : i32, i32
  }
  func.func @transform_2(%arg0: i32, %arg1: i32, %arg2: i32) -> (i32, i32) {
    %c0_i32 = arith.constant 0 : i32
    %c0_i32_0 = arith.constant 0 : i32
    return %arg2, %c0_i32 : i32, i32
  }
  func.func @transform_3(%arg0: i32, %arg1: i32, %arg2: i32) -> (i32, i32) {
    %c0_i32 = arith.constant 0 : i32
    %c0_i32_0 = arith.constant 0 : i32
    return %c0_i32, %arg1 : i32, i32
  }
  func.func @transform_4(%arg0: i32, %arg1: i32, %arg2: i32) -> (i32, i32) {
    %c0_i32 = arith.constant 0 : i32
    %c0_i32_0 = arith.constant 0 : i32
    return %c0_i32, %arg1 : i32, i32
  }
  func.func @transform_5(%arg0: i32, %arg1: i32, %arg2: i32) -> (i32, i32) {
    %c0_i32 = arith.constant 0 : i32
    return %arg0, %arg1 : i32, i32
  }
}

</mosaic_0001>

<llo_original>
// kernel: tpu_custom_call.1
$region0: #{tpu_custom_call.1}
  #allocation0 [shape = 'u32[]', space=smem, size = 0x4, offset = 0x4, fixed_abs, tag = 'smem constant byte address 0x4 - core index']
  #allocation1 [shape = 'u32[144,128]{1,0:T(1,128)}', space=vmem, size = 0x12000, scoped, tag = 'internal scratch']
  #allocation2 [shape = 'f32[16,128]{1,0:T(8,128)}', space=vmem, size = 0x2000, scoped, tag = 'scratch operand']
  #allocation3 [shape = 'f32[16,8]{1,0:T(8,128)}', space=vmem, size = 0x2000, scoped, tag = 'scratch operand']
  %s0 = inlined_call_operand.hbm [shape: f32[16,128], index: 0, kind: input, shape index: {}]
  %s1 = inlined_call_operand.vmem [shape: f32[128,128], index: 1, kind: input, shape index: {}]
  %s2 = inlined_call_operand.vmem [shape: f32[128,8], index: 2, kind: input, shape index: {}]
  %s3 = inlined_call_operand.vmem [shape: f32[8,128], index: 3, kind: input, shape index: {}]
  %s4 = inlined_call_operand.vmem [shape: f32[1,128], index: 4, kind: input, shape index: {}]
  %s5 = inlined_call_operand.hbm [shape: f32[16,128], index: 5, kind: output, shape index: {}]
  %s6 = sld [smem:[#allocation0]]
  $region50: #{tpu_custom_call.1} parent=0
    _
  %s8 = ssub.s32 1, %s6
  %s9 = scalar_select 0, %s8, %s6
  $region1: #{tpu_custom_call.1} parent=0
    #allocation4 [shape = 'u8[8192]{0}', space=vmem, size = 0x2000, scoped, tag = 'input window, operand 0, single buffered']
    #allocation5 [shape = 's32[1]{0}', space=sflag, size = 0x4, scoped, tag = 'scoped memory for tpu_custom_call.1']
    #allocation6 [shape = 's32[1]{0}', space=sflag, size = 0x4, scoped, tag = 'scoped memory for tpu_custom_call.1']
    #allocation7 [shape = 'u8[8192]{0}', space=vmem, size = 0x2000, scoped, tag = 'output window, operand 0, single buffered']
    %10 = vsyncpa [#allocation5], 0
    %11 = vsyncpa [#allocation6], 0
    // Predicated region
    $region2: #{tpu_custom_call.1} parent=1 // pred_check
      _
    $region3: #{tpu_custom_call.1} parent=1 // pred_check_branch
      %13 = sbr.rel (0) target = $region5
    $region4: #{tpu_custom_call.1} parent=1 // pred_region
      %s15 = ssub.s32 256, 256
      %16 = vsyncadd [#allocation5], %s15
      %s17 = sshll.u32 [#allocation4], 4
      %s18 = int_to_ptr.vmem [resolvable:$true] %s17
      %23 = dma.hbm_to_vmem [thread:$0]  %s0, 256, %s18, [#allocation5], 128, 128, 8
    $region5: #{tpu_custom_call.1} parent=1 // pred_fallthru
      _
    // Predicated region
    $region6: #{tpu_custom_call.1} parent=1 // pred_check
      _
    $region7: #{tpu_custom_call.1} parent=1 // pred_check_branch
      %25 = sbr.rel (0) target = $region9
    $region8: #{tpu_custom_call.1} parent=1 // pred_region
      _
    $region9: #{tpu_custom_call.1} parent=1 // pred_fallthru
      _
    // Predicated region
    $region10: #{tpu_custom_call.1} parent=1 // pred_check
      _
    $region11: #{tpu_custom_call.1} parent=1 // pred_check_branch
      %27 = sbr.rel (0) target = $region13
    $region12: #{tpu_custom_call.1} parent=1 // pred_region
      _
    $region13: #{tpu_custom_call.1} parent=1 // pred_fallthru
      _
    // Predicated region
    $region14: #{tpu_custom_call.1} parent=1 // pred_check
      _
    $region15: #{tpu_custom_call.1} parent=1 // pred_check_branch
      %29 = sbr.rel (0) target = $region17
    $region16: #{tpu_custom_call.1} parent=1 // pred_region
      _
    $region17: #{tpu_custom_call.1} parent=1 // pred_fallthru
      _
    // Predicated region
    $region18: #{tpu_custom_call.1} parent=1 // pred_check
      _
    $region19: #{tpu_custom_call.1} parent=1 // pred_check_branch
      %31 = sbr.rel (0) target = $region21
    $region20: #{tpu_custom_call.1} parent=1 // pred_region
      _
    $region21: #{tpu_custom_call.1} parent=1 // pred_fallthru
      _
    // Predicated region
    $region22: #{tpu_custom_call.1} parent=1 // pred_check
      _
    $region23: #{tpu_custom_call.1} parent=1 // pred_check_branch
      %33 = sbr.rel (0) target = $region25
    $region24: #{tpu_custom_call.1} parent=1 // pred_region
      %34 = dma.done [#allocation5], 256
    $region25: #{tpu_custom_call.1} parent=1 // pred_fallthru
      _
    %p35 = scmp.eq.s32.totalorder 0, 0
    // Predicated region
    $region26: #{tpu_custom_call.1} parent=1 // pred_check
      %p36 = pneg %p35
    $region27: #{tpu_custom_call.1} parent=1 // pred_check_branch
      %38 = sbr.rel (%p36) target = $region29
    $region28: #{tpu_custom_call.1} parent=1 // pred_region
      %39 = vst [vmem:[#allocation2] sm:$0xff] 0.0
      %40 = vst [vmem:[#allocation2 + $0x8] sm:$0xff] 0.0
    $region29: #{tpu_custom_call.1} parent=1 // pred_fallthru
      _
    %p41 = scmp.eq.s32.totalorder 0, 0
    %p42 = pnand %p41, %p35
    %p43 = pneg %p42
    // Predicated region
    $region30: #{tpu_custom_call.1} parent=1 // pred_check
      _
    $region31: #{tpu_custom_call.1} parent=1 // pred_check_branch
      %45 = sbr.rel (%p42) target = $region33
    $region32: #{tpu_custom_call.1} parent=1 // pred_region
      %vm46 = vcmask 64512
      %47 = vst.msk [vmem:[#allocation3] sm:$0xff] %vm46, 0.0
      %48 = vst.msk [vmem:[#allocation3 + $0x8] sm:$0xff] %vm46, 0.0
    $region33: #{tpu_custom_call.1} parent=1 // pred_fallthru
      _
    %v49 = vld [vmem:[#allocation4] sm:$0xff]
    %v50 = vld [vmem:[#allocation4 + $0x8] sm:$0xff]
    %v51 = vld [vmem:[#allocation2] sm:$0xff]
    %v52 = vld [vmem:[#allocation2 + $0x8] sm:$0xff]
    %v53 = vld [vmem:[%s1] sm:$0xff]
    %v54 = vld [vmem:[%s1 + $0x8] sm:$0xff]
    %v55 = vld [vmem:[%s1 + $0x10] sm:$0xff]
    %v56 = vld [vmem:[%s1 + $0x18] sm:$0xff]
    %v57 = vld [vmem:[%s1 + $0x20] sm:$0xff]
    %v58 = vld [vmem:[%s1 + $0x28] sm:$0xff]
    %v59 = vld [vmem:[%s1 + $0x30] sm:$0xff]
    %v60 = vld [vmem:[%s1 + $0x38] sm:$0xff]
    %v61 = vld [vmem:[%s1 + $0x40] sm:$0xff]
    %v62 = vld [vmem:[%s1 + $0x48] sm:$0xff]
    %v63 = vld [vmem:[%s1 + $0x50] sm:$0xff]
    %v64 = vld [vmem:[%s1 + $0x58] sm:$0xff]
    %v65 = vld [vmem:[%s1 + $0x60] sm:$0xff]
    %v66 = vld [vmem:[%s1 + $0x68] sm:$0xff]
    %v67 = vld [vmem:[%s1 + $0x70] sm:$0xff]
    %v68 = vld [vmem:[%s1 + $0x78] sm:$0xff]
    %69 = vmatprep.subr.mxu0 0.0
    %70 = vmatpush1.msra.mxu0 %v53
    %71 = vmatprep.subr.mxu0 0.0
    %72 = vmatpush1.msra.mxu0 %v54
    %73 = vmatprep.subr.mxu0 0.0
    %74 = vmatpush1.msra.mxu0 %v55
    %75 = vmatprep.subr.mxu0 0.0
    %76 = vmatpush1.msra.mxu0 %v56
    %77 = vmatprep.subr.mxu0 0.0
    %78 = vmatpush1.msra.mxu0 %v57
    %79 = vmatprep.subr.mxu0 0.0
    %80 = vmatpush1.msra.mxu0 %v58
    %81 = vmatprep.subr.mxu0 0.0
    %82 = vmatpush1.msra.mxu0 %v59
    %83 = vmatprep.subr.mxu0 0.0
    %84 = vmatpush1.msra.mxu0 %v60
    %85 = vmatprep.subr.mxu0 0.0
    %86 = vmatpush1.msra.mxu0 %v61
    %87 = vmatprep.subr.mxu0 0.0
    %88 = vmatpush1.msra.mxu0 %v62
    %89 = vmatprep.subr.mxu0 0.0
    %90 = vmatpush1.msra.mxu0 %v63
    %91 = vmatprep.subr.mxu0 0.0
    %92 = vmatpush1.msra.mxu0 %v64
    %93 = vmatprep.subr.mxu0 0.0
    %94 = vmatpush1.msra.mxu0 %v65
    %95 = vmatprep.subr.mxu0 0.0
    %96 = vmatpush1.msra.mxu0 %v66
    %97 = vmatprep.subr.mxu0 0.0
    %98 = vmatpush1.msra.mxu0 %v67
    %99 = vmatprep.subr.mxu0 0.0
    %100 = vmatpush1.msra.mxu0 %v68
    %101 = vmatprep.subr.mxu0 0.0
    %102 = vmatpush1.msra.mxu0 0.0
    %103 = vmatprep.subr.mxu0 0.0
    %104 = vmatpush1.msra.mxu0 0.0
    %105 = vmatprep.subr.mxu0 0.0
    %106 = vmatpush1.msra.mxu0 0.0
    %107 = vmatprep.subr.mxu0 0.0
    %108 = vmatpush1.msra.mxu0 0.0
    %109 = vmatprep.subr.mxu0 0.0
    %110 = vmatpush1.msra.mxu0 0.0
    %111 = vmatprep.subr.mxu0 0.0
    %112 = vmatpush1.msra.mxu0 0.0
    %113 = vmatprep.subr.mxu0 0.0
    %114 = vmatpush1.msra.mxu0 0.0
    %115 = vmatprep.subr.mxu0 0.0
    %116 = vmatpush1.msra.mxu0 0.0
    %117 = vmatprep.subr.mxu0 0.0
    %118 = vmatpush1.msra.mxu0 0.0
    %119 = vmatprep.subr.mxu0 0.0
    %120 = vmatpush1.msra.mxu0 0.0
    %121 = vmatprep.subr.mxu0 0.0
    %122 = vmatpush1.msra.mxu0 0.0
    %123 = vmatprep.subr.mxu0 0.0
    %124 = vmatpush1.msra.mxu0 0.0
    %125 = vmatprep.subr.mxu0 0.0
    %126 = vmatpush1.msra.mxu0 0.0
    %127 = vmatprep.subr.mxu0 0.0
    %128 = vmatpush1.msra.mxu0 0.0
    %129 = vmatprep.subr.mxu0 0.0
    %130 = vmatpush1.msra.mxu0 0.0
    %131 = vmatprep.subr.mxu0 0.0
    %132 = vmatpush1.msra.mxu0 0.0
    %133 = vmatprep.mubr.f32.mxu0 0.0
    %134 = vmatmul.mubr.f32.gmra.mrb[0].mxu0 %v49
    %v135 = vpop.f32.mrb[0].mxu0
    %v136 = vadd.f32 0.0, %v135
    %v137 = vpop.f32.mrb[0].mxu0
    %138 = vmatprep.mubr.f32.mxu0 0.0
    %139 = vmatmul.mubr.f32.gmra.mrb[0].mxu0 %v50
    %v140 = vpop.f32.mrb[0].mxu0
    %v141 = vadd.f32 0.0, %v140
    %v142 = vpop.f32.mrb[0].mxu0
    %143 = vdwg.mxu0
    %v144 = vadd.f32 %v51, %v136
    %v145 = vadd.f32 %v52, %v141
    %146 = vst [vmem:[#allocation2] sm:$0xff] %v144
    %147 = vst [vmem:[#allocation2 + $0x8] sm:$0xff] %v145
    // Predicated region
    $region34: #{tpu_custom_call.1} parent=1 // pred_check
      %p148 = pneg %p41
    $region35: #{tpu_custom_call.1} parent=1 // pred_check_branch
      %150 = sbr.rel (%p148) target = $region37
    $region36: #{tpu_custom_call.1} parent=1 // pred_region
      %v151 = vld [vmem:[#allocation3] sm:$0xff]
      %v152 = vld [vmem:[#allocation3 + $0x8] sm:$0xff]
      %v153 = vld [vmem:[%s2] sm:$0xff]
      %v154 = vld [vmem:[%s2 + $0x8] sm:$0xff]
      %v155 = vld [vmem:[%s2 + $0x10] sm:$0xff]
      %v156 = vld [vmem:[%s2 + $0x18] sm:$0xff]
      %v157 = vld [vmem:[%s2 + $0x20] sm:$0xff]
      %v158 = vld [vmem:[%s2 + $0x28] sm:$0xff]
      %v159 = vld [vmem:[%s2 + $0x30] sm:$0xff]
      %v160 = vld [vmem:[%s2 + $0x38] sm:$0xff]
      %v161 = vld [vmem:[%s2 + $0x40] sm:$0xff]
      %v162 = vld [vmem:[%s2 + $0x48] sm:$0xff]
      %v163 = vld [vmem:[%s2 + $0x50] sm:$0xff]
      %v164 = vld [vmem:[%s2 + $0x58] sm:$0xff]
      %v165 = vld [vmem:[%s2 + $0x60] sm:$0xff]
      %v166 = vld [vmem:[%s2 + $0x68] sm:$0xff]
      %v167 = vld [vmem:[%s2 + $0x70] sm:$0xff]
      %v168 = vld [vmem:[%s2 + $0x78] sm:$0xff]
      %169 = vmatprep.subr.mxu0 0.0
      %170 = vmatpush1.msra.mxu0 %v153
      %171 = vmatprep.subr.mxu0 0.0
      %172 = vmatpush1.msra.mxu0 %v154
      %173 = vmatprep.subr.mxu0 0.0
      %174 = vmatpush1.msra.mxu0 %v155
      %175 = vmatprep.subr.mxu0 0.0
      %176 = vmatpush1.msra.mxu0 %v156
      %177 = vmatprep.subr.mxu0 0.0
      %178 = vmatpush1.msra.mxu0 %v157
      %179 = vmatprep.subr.mxu0 0.0
      %180 = vmatpush1.msra.mxu0 %v158
      %181 = vmatprep.subr.mxu0 0.0
      %182 = vmatpush1.msra.mxu0 %v159
      %183 = vmatprep.subr.mxu0 0.0
      %184 = vmatpush1.msra.mxu0 %v160
      %185 = vmatprep.subr.mxu0 0.0
      %186 = vmatpush1.msra.mxu0 %v161
      %187 = vmatprep.subr.mxu0 0.0
      %188 = vmatpush1.msra.mxu0 %v162
      %189 = vmatprep.subr.mxu0 0.0
      %190 = vmatpush1.msra.mxu0 %v163
      %191 = vmatprep.subr.mxu0 0.0
      %192 = vmatpush1.msra.mxu0 %v164
      %193 = vmatprep.subr.mxu0 0.0
      %194 = vmatpush1.msra.mxu0 %v165
      %195 = vmatprep.subr.mxu0 0.0
      %196 = vmatpush1.msra.mxu0 %v166
      %197 = vmatprep.subr.mxu0 0.0
      %198 = vmatpush1.msra.mxu0 %v167
      %199 = vmatprep.subr.mxu0 0.0
      %200 = vmatpush1.msra.mxu0 %v168
      %201 = vmatprep.subr.mxu0 0.0
      %202 = vmatpush1.msra.mxu0 0.0
      %203 = vmatprep.subr.mxu0 0.0
      %204 = vmatpush1.msra.mxu0 0.0
      %205 = vmatprep.subr.mxu0 0.0
      %206 = vmatpush1.msra.mxu0 0.0
      %207 = vmatprep.subr.mxu0 0.0
      %208 = vmatpush1.msra.mxu0 0.0
      %209 = vmatprep.subr.mxu0 0.0
      %210 = vmatpush1.msra.mxu0 0.0
      %211 = vmatprep.subr.mxu0 0.0
      %212 = vmatpush1.msra.mxu0 0.0
      %213 = vmatprep.subr.mxu0 0.0
      %214 = vmatpush1.msra.mxu0 0.0
      %215 = vmatprep.subr.mxu0 0.0
      %216 = vmatpush1.msra.mxu0 0.0
      %217 = vmatprep.subr.mxu0 0.0
      %218 = vmatpush1.msra.mxu0 0.0
      %219 = vmatprep.subr.mxu0 0.0
      %220 = vmatpush1.msra.mxu0 0.0
      %221 = vmatprep.subr.mxu0 0.0
      %222 = vmatpush1.msra.mxu0 0.0
      %223 = vmatprep.subr.mxu0 0.0
      %224 = vmatpush1.msra.mxu0 0.0
      %225 = vmatprep.subr.mxu0 0.0
      %226 = vmatpush1.msra.mxu0 0.0
      %227 = vmatprep.subr.mxu0 0.0
      %228 = vmatpush1.msra.mxu0 0.0
      %229 = vmatprep.subr.mxu0 0.0
      %230 = vmatpush1.msra.mxu0 0.0
      %231 = vmatprep.subr.mxu0 0.0
      %232 = vmatpush1.msra.mxu0 0.0
      %233 = vmatprep.mubr.f32.mxu0 0.0
      %234 = vmatmul.mubr.f32.gmra.mrb[0].mxu0 %v49
      %v235 = vpop.f32.mrb[0].mxu0
      %v236 = vadd.f32 0.0, %v235
      %v237 = vpop.f32.mrb[0].mxu0
      %238 = vmatprep.mubr.f32.mxu0 0.0
      %239 = vmatmul.mubr.f32.gmra.mrb[0].mxu0 %v50
      %v240 = vpop.f32.mrb[0].mxu0
      %v241 = vadd.f32 0.0, %v240
      %v242 = vpop.f32.mrb[0].mxu0
      %243 = vdwg.mxu0
      %v244 = vadd.f32 %v151, %v236
      %v245 = vadd.f32 %v152, %v241
      %vm246 = vcmask 64512
      %247 = vst.msk [vmem:[#allocation3] sm:$0xff] %vm246, %v244
      %248 = vst.msk [vmem:[#allocation3 + $0x8] sm:$0xff] %vm246, %v245
    $region37: #{tpu_custom_call.1} parent=1 // pred_fallthru
      _
    // Predicated region
    $region38: #{tpu_custom_call.1} parent=1 // pred_check
      %p249 = pneg %p35
    $region39: #{tpu_custom_call.1} parent=1 // pred_check_branch
      %251 = sbr.rel (%p249) target = $region41
    $region40: #{tpu_custom_call.1} parent=1 // pred_region
      %v252 = vld [vmem:[#allocation3] sm:$0xff]
      %v253 = vld [vmem:[#allocation3 + $0x8] sm:$0xff]
      %v254 = vld [vmem:[%s3] sm:$0xff]
      %vm255 = vcmask 64512
      %v257 = vsel %vm255, %v252, 0
      %v260 = vsel %vm255, %v253, 0
      %262 = vmatprep.subr.mxu0 0.0
      %263 = vmatpush1.msra.mxu0 %v254
      %264 = vmatprep.subr.mxu0 0.0
      %265 = vmatpush1.msra.mxu0 0.0
      %266 = vmatprep.subr.mxu0 0.0
      %267 = vmatpush1.msra.mxu0 0.0
      %268 = vmatprep.subr.mxu0 0.0
      %269 = vmatpush1.msra.mxu0 0.0
      %270 = vmatprep.subr.mxu0 0.0
      %271 = vmatpush1.msra.mxu0 0.0
      %272 = vmatprep.subr.mxu0 0.0
      %273 = vmatpush1.msra.mxu0 0.0
      %274 = vmatprep.subr.mxu0 0.0
      %275 = vmatpush1.msra.mxu0 0.0
      %276 = vmatprep.subr.mxu0 0.0
      %277 = vmatpush1.msra.mxu0 0.0
      %278 = vmatprep.subr.mxu0 0.0
      %279 = vmatpush1.msra.mxu0 0.0
      %280 = vmatprep.subr.mxu0 0.0
      %281 = vmatpush1.msra.mxu0 0.0
      %282 = vmatprep.subr.mxu0 0.0
      %283 = vmatpush1.msra.mxu0 0.0
      %284 = vmatprep.subr.mxu0 0.0
      %285 = vmatpush1.msra.mxu0 0.0
      %286 = vmatprep.subr.mxu0 0.0
      %287 = vmatpush1.msra.mxu0 0.0
      %288 = vmatprep.subr.mxu0 0.0
      %289 = vmatpush1.msra.mxu0 0.0
      %290 = vmatprep.subr.mxu0 0.0
      %291 = vmatpush1.msra.mxu0 0.0
      %292 = vmatprep.subr.mxu0 0.0
      %293 = vmatpush1.msra.mxu0 0.0
      %294 = vmatprep.subr.mxu0 0.0
      %295 = vmatpush1.msra.mxu0 0.0
      %296 = vmatprep.subr.mxu0 0.0
      %297 = vmatpush1.msra.mxu0 0.0
      %298 = vmatprep.subr.mxu0 0.0
      %299 = vmatpush1.msra.mxu0 0.0
      %300 = vmatprep.subr.mxu0 0.0
      %301 = vmatpush1.msra.mxu0 0.0
      %302 = vmatprep.subr.mxu0 0.0
      %303 = vmatpush1.msra.mxu0 0.0
      %304 = vmatprep.subr.mxu0 0.0
      %305 = vmatpush1.msra.mxu0 0.0
      %306 = vmatprep.subr.mxu0 0.0
      %307 = vmatpush1.msra.mxu0 0.0
      %308 = vmatprep.subr.mxu0 0.0
      %309 = vmatpush1.msra.mxu0 0.0
      %310 = vmatprep.subr.mxu0 0.0
      %311 = vmatpush1.msra.mxu0 0.0
      %312 = vmatprep.subr.mxu0 0.0
      %313 = vmatpush1.msra.mxu0 0.0
      %314 = vmatprep.subr.mxu0 0.0
      %315 = vmatpush1.msra.mxu0 0.0
      %316 = vmatprep.subr.mxu0 0.0
      %317 = vmatpush1.msra.mxu0 0.0
      %318 = vmatprep.subr.mxu0 0.0
      %319 = vmatpush1.msra.mxu0 0.0
      %320 = vmatprep.subr.mxu0 0.0
      %321 = vmatpush1.msra.mxu0 0.0
      %322 = vmatprep.subr.mxu0 0.0
      %323 = vmatpush1.msra.mxu0 0.0
      %324 = vmatprep.subr.mxu0 0.0
      %325 = vmatpush1.msra.mxu0 0.0
      %326 = vmatprep.mubr.f32.mxu0 0.0
      %327 = vmatmul.mubr.f32.gmra.mrb[0].mxu0 %v257
      %v328 = vpop.f32.mrb[0].mxu0
      %v329 = vadd.f32 0.0, %v328
      %v330 = vpop.f32.mrb[0].mxu0
      %331 = vmatprep.mubr.f32.mxu0 0.0
      %332 = vmatmul.mubr.f32.gmra.mrb[0].mxu0 %v260
      %v333 = vpop.f32.mrb[0].mxu0
      %v334 = vadd.f32 0.0, %v333
      %v335 = vpop.f32.mrb[0].mxu0
      %336 = vdwg.mxu0
      %v337 = vld [vmem:[#allocation2] sm:$0xff]
      %v338 = vld [vmem:[#allocation2 + $0x8] sm:$0xff]
      %v339 = vadd.f32 %v337, %v329
      %v340 = vadd.f32 %v338, %v334
      %v341 = vld [vmem:[%s4] sm:$0x1]
      %v343 = vlaneseq
      %v344 = vshrl.u32 %v343, 7
      %v345 = vsub.s32 0, %v344
      %v346 = vrot.slane %v341, %v345
      %v348 = vadd.f32 %v339, %v346
      %v349 = vadd.f32 %v340, %v346
      %350 = vst [vmem:[#allocation7] sm:$0xff] %v348
      %351 = vst [vmem:[#allocation7 + $0x8] sm:$0xff] %v349
    $region41: #{tpu_custom_call.1} parent=1 // pred_fallthru
      _
    // Predicated region
    $region42: #{tpu_custom_call.1} parent=1 // pred_check
      _
    $region43: #{tpu_custom_call.1} parent=1 // pred_check_branch
      %353 = sbr.rel (0) target = $region45
    $region44: #{tpu_custom_call.1} parent=1 // pred_region
      %s355 = ssub.s32 256, 256
      %356 = vsyncadd [#allocation6], %s355
      %s357 = sshll.u32 [#allocation7], 4
      %s358 = int_to_ptr.vmem [resolvable:$true] %s357
      %363 = dma.vmem_to_hbm [thread:$0]  %s358, 256, %s5, [#allocation6], 128, 128, 8
    $region45: #{tpu_custom_call.1} parent=1 // pred_fallthru
      _
    // Predicated region
    $region46: #{tpu_custom_call.1} parent=1 // pred_check
      _
    $region47: #{tpu_custom_call.1} parent=1 // pred_check_branch
      %365 = sbr.rel (0) target = $region49
    $region48: #{tpu_custom_call.1} parent=1 // pred_region
      %366 = dma.done [#allocation6], 256
    $region49: #{tpu_custom_call.1} parent=1 // pred_fallthru
      _
    %367 = vsyncpa [#allocation5], 1
    %368 = vsyncpa [#allocation6], 1

</llo_original>
